<compile_context>
chip_gen: v5e
topology: v5e:2x2
jax: 0.10.0
libtpu: 0.0.40
codegen_flags: <defaults>
</compile_context>

<pallas_src>
import jax
import jax.numpy as jnp
from jax.experimental import pallas as pl
from jax.experimental.pallas import tpu as pltpu

EPS = 1e-5  # PyTorch nn.LayerNorm default


def _round_up(x, m):
    return (x + m - 1) // m * m


def _physical_vmem_bytes():
    """Per-TensorCore physical VMEM, from the device kind (conservative default)."""
    try:
        kind = jax.devices()[0].device_kind.lower()
    except Exception:
        kind = ""
    if "v7" in kind:
        return 64 << 20            # v7x: 64 MiB / TC
    if "v4" in kind or "v5" in kind or "v6" in kind:
        return 128 << 20           # v4 / v5e / v6e: 128 MiB
    return 64 << 20                # unknown: be conservative


def _const_spec(shape):
    """BlockSpec for an operand whose block never changes across the grid.
    Single-buffered: no point double-buffering a constant block, and it halves
    the resident weight VMEM footprint (the biggest VMEM lever)."""
    idx = lambda i: (0,) * len(shape)
    if hasattr(pl, "Buffered"):
        try:
            return pl.BlockSpec(shape, idx, pipeline_mode=pl.Buffered(1))
        except TypeError:
            pass
    return pl.BlockSpec(shape, idx)


def _make_kernel(d_model, chunk_ff, n_chunks):
    inv_d = 1.0 / float(d_model)     # divide by the REAL feature count
    unroll = n_chunks <= 4

    def kernel(x_ref, vecs_ref, b1_ref, w1_ref, w2_ref, o_ref, acc_ref):
        x = x_ref[...].astype(jnp.float32)                   # (tm, Dp)
        vecs = vecs_ref[...]                                 # (8, Dp) f32
        g1, be1 = vecs[0:1, :], vecs[1:2, :]
        b2, g2, be2 = vecs[2:3, :], vecs[3:4, :], vecs[4:5, :]

        # --- pre-LayerNorm (f32, one-pass variance).  Padded feature lanes of
        # x are zero, so the lane sums divided by the real d_model are exact.
        sx = jnp.sum(x, axis=-1, keepdims=True)
        sxx = jnp.sum(x * x, axis=-1, keepdims=True)
        mu = sx * inv_d
        var = sxx * inv_d - mu * mu
        y = (x - mu) * jax.lax.rsqrt(var + EPS)
        y = y * g1 + be1                 # padded lanes -> 0 (gamma/beta pad = 0)
        y_bf = y.astype(jnp.bfloat16)    # bf16 MXU operands, f32 accumulation

        # --- FFN: w2(relu(w1(y)+b1)), chunked over d_ff so the full
        # (tm, d_ff) f32 hidden never materializes.
        acc_ref[...] = jnp.zeros_like(acc_ref)

        @pl.loop(0, n_chunks, unroll=unroll)
        def _(j):
            off = pl.multiple_of(j * chunk_ff, chunk_ff)
            w1c = w1_ref[:, pl.ds(off, chunk_ff)]            # (Dp, chunk) bf16
            b1c = b1_ref[:, pl.ds(off, chunk_ff)]            # (1, chunk)  f32
            h = jnp.dot(y_bf, w1c, preferred_element_type=jnp.float32) + b1c
            h = jnp.maximum(h, 0.0).astype(jnp.bfloat16)     # ReLU, cast right away
            # TODO(synk): dropout omitted (identity at inference / eval mode)
            w2c = w2_ref[pl.ds(off, chunk_ff), :]            # (chunk, Dp) bf16
            acc_ref[...] += jnp.dot(h, w2c, preferred_element_type=jnp.float32)

        # --- residual add (padded lanes stay exactly 0) ---
        r = x + acc_ref[...] + b2

        # --- out_norm (post-LayerNorm, f32, one-pass variance) ---
        sr = jnp.sum(r, axis=-1, keepdims=True)
        srr = jnp.sum(r * r, axis=-1, keepdims=True)
        mu2 = sr * inv_d
        var2 = srr * inv_d - mu2 * mu2
        out = (r - mu2) * jax.lax.rsqrt(var2 + EPS)
        out = out * g2 + be2

        o_ref[...] = out.astype(o_ref.dtype)

    return kernel


def feedforward_wrapper_add(x, params, *, tm=None):
    """x: [..., d_model] float32.  params: dict of weights (see init_params)."""
    d_model = x.shape[-1]
    d_ff = params["w1"].shape[1]
    orig_shape = x.shape
    out_dtype = x.dtype   # keep module semantics (f32 out); switch to bf16 if
                          # downstream accepts it (halves HBM writeback).

    # Feature padding to lane-dense multiples of 128.
    D_pad = _round_up(d_model, 128)
    f128 = _round_up(d_ff, 128)
    chunk_ff = min(512, f128)
    n_chunks = pl.cdiv(f128, chunk_ff)
    F_pad = n_chunks * chunk_ff

    x2 = x.reshape(-1, d_model).astype(jnp.float32)
    M = x2.shape[0]

    phys = _physical_vmem_bytes()
    vmem_cap = (phys // 4) * 3        # 96 MiB on v5e/v6e, 48 MiB on v7x

    # Row tile: 512 on 128-MiB chips, 256 on v7x; never more than the
    # sublane-padded row count; shrink if the VMEM budget doesn't fit.
    if tm is None:
        tm = 512 if phys >= (128 << 20) else 256
    tm = min(tm, _round_up(M, 8))

    w_bytes = 2 * D_pad * F_pad * 2            # w1 + w2, bf16, single-buffered
    vec_bytes = 8 * D_pad * 4 + F_pad * 4      # packed vectors + b1

    def vmem_need(tm_):
        io = 2 * 2 * tm_ * D_pad * 4           # double-buffered x + out tiles
        acc = tm_ * D_pad * 4                  # f32 accumulator scratch
        hid = tm_ * chunk_ff * 6               # transient hidden chunk (f32 + bf16)
        return w_bytes + vec_bytes + io + acc + hid

    while tm > 128 and vmem_need(tm) > vmem_cap:
        tm //= 2
    # TODO(synk): if the bf16 weights alone exceed the v7x cap, add a d_ff grid
    # axis (stream w1/w2 chunks from HBM) or use fp8 weights; not needed here.

    M_pad = _round_up(M, tm)

    # Pad rows + feature lanes with zeros (zero rows give finite LN output and
    # are sliced off; zero feature lanes are exact thanks to the real-d_model
    # divisor and zero-padded gamma/beta/bias).
    x2 = jnp.pad(x2, ((0, M_pad - M), (0, D_pad - d_model)))

    # Pack the five (d_model,) vectors into one (8, D_pad) f32 slab:
    # rows = gamma1, beta1, b2, gamma2, beta2, 3 pad rows.  Keep b1 separate.
    vecs = jnp.zeros((8, D_pad), jnp.float32)
    for row, name in enumerate(
            ("ln1_gamma", "ln1_beta", "b2", "ln2_gamma", "ln2_beta")):
        vecs = vecs.at[row, :d_model].set(params[name].astype(jnp.float32))
    b1 = jnp.zeros((1, F_pad), jnp.float32).at[0, :d_ff].set(
        params["b1"].astype(jnp.float32))

    def pad2(a, r, c):
        return jnp.pad(a, ((0, r - a.shape[0]), (0, c - a.shape[1])))

    w1 = pad2(params["w1"].astype(jnp.float32), D_pad, F_pad).astype(jnp.bfloat16)
    w2 = pad2(params["w2"].astype(jnp.float32), F_pad, D_pad).astype(jnp.bfloat16)

    vmem_limit = int(min(max(vmem_need(tm) * 3 // 2, 32 << 20), vmem_cap))

    itemsize = jnp.dtype(out_dtype).itemsize
    cost = pl.CostEstimate(
        flops=4 * M_pad * D_pad * F_pad,                  # two matmuls
        transcendentals=2 * M_pad,                        # two rsqrt per row
        bytes_accessed=(M_pad * D_pad * 4                 # x read (f32)
                        + M_pad * D_pad * itemsize        # out write (real dtype)
                        + w_bytes + vec_bytes),
    )

    kernel = _make_kernel(d_model, chunk_ff, n_chunks)

    out = pl.pallas_call(
        kernel,
        out_shape=jax.ShapeDtypeStruct((M_pad, D_pad), out_dtype),
        grid_spec=pltpu.PrefetchScalarGridSpec(
            num_scalar_prefetch=0,
            grid=(M_pad // tm,),
            in_specs=[
                pl.BlockSpec((tm, D_pad), lambda i: (i, 0)),  # x rows (pipelined)
                _const_spec((8, D_pad)),                      # packed LN/bias vecs
                _const_spec((1, F_pad)),                      # b1
                _const_spec((D_pad, F_pad)),                  # w1 (bf16, resident)
                _const_spec((F_pad, D_pad)),                  # w2 (bf16, resident)
            ],
            out_specs=pl.BlockSpec((tm, D_pad), lambda i: (i, 0)),
            scratch_shapes=[pltpu.VMEM((tm, D_pad), jnp.float32)],
        ),
        compiler_params=pltpu.CompilerParams(
            dimension_semantics=("parallel",),
            vmem_limit_bytes=vmem_limit),
        cost_estimate=cost,
    )(x2, vecs, b1, w1, w2)

    return out[:M, :d_model].reshape(orig_shape)


def init_params(key, d_model, d_ff):
    """Deterministic synthetic parameter init (PyTorch-like shapes, stored
    transposed for right-multiplication: w1:[d_model,d_ff], w2:[d_ff,d_model])."""
    k1, k2, k3, k4, k5, k6 = jax.random.split(key, 6)
    s1 = 1.0 / jnp.sqrt(d_model)
    s2 = 1.0 / jnp.sqrt(d_ff)
    return {
        "w1": jax.random.uniform(k1, (d_model, d_ff), jnp.float32, -s1, s1),
        "b1": jax.random.uniform(k2, (d_ff,), jnp.float32, -s1, s1),
        "w2": jax.random.uniform(k3, (d_ff, d_model), jnp.float32, -s2, s2),
        "b2": jax.random.uniform(k4, (d_model,), jnp.float32, -s2, s2),
        # LayerNorm affine params (perturbed from default 1/0 to be nontrivial)
        "ln1_gamma": 1.0 + 0.1 * jax.random.normal(k5, (d_model,), jnp.float32),
        "ln1_beta": jnp.zeros((d_model,), jnp.float32),
        "ln2_gamma": 1.0 + 0.1 * jax.random.normal(k6, (d_model,), jnp.float32),
        "ln2_beta": jnp.zeros((d_model,), jnp.float32),
    }


def _ln_twopass(v, g, b):
    mu = jnp.mean(v, axis=-1, keepdims=True)
    var = jnp.mean((v - mu) ** 2, axis=-1, keepdims=True)
    return (v - mu) / jnp.sqrt(var + EPS) * g + b


def _ln_onepass(v, g, b):
    mu = jnp.mean(v, axis=-1, keepdims=True)
    var = jnp.mean(v * v, axis=-1, keepdims=True) - mu * mu
    return (v - mu) * jax.lax.rsqrt(var + EPS) * g + b


def _reference_f32(x, p):
    """Pure-JAX f32 reference (module semantics)."""
    y = _ln_twopass(x, p["ln1_gamma"], p["ln1_beta"])
    h = jnp.maximum(y @ p["w1"] + p["b1"], 0.0)
    f = h @ p["w2"] + p["b2"]
    return _ln_twopass(x + f, p["ln2_gamma"], p["ln2_beta"])


def _reference_bf16(x, p):
    """Reference mirroring the kernel's precision: f32 LN (one-pass variance),
    bf16 matmul operands with f32 accumulation, bf16 hidden after ReLU."""
    y = _ln_onepass(x, p["ln1_gamma"], p["ln1_beta"])
    h = jnp.dot(y.astype(jnp.bfloat16), p["w1"].astype(jnp.bfloat16),
                preferred_element_type=jnp.float32) + p["b1"]
    h = jnp.maximum(h, 0.0)
    f = jnp.dot(h.astype(jnp.bfloat16), p["w2"].astype(jnp.bfloat16),
                preferred_element_type=jnp.float32) + p["b2"]
    return _ln_onepass(x + f, p["ln2_gamma"], p["ln2_beta"])


if __name__ == "__main__":
    # Module: FeedForwardWarrperAdd(input_size, hidden_size, output_size)
    # forward operates on feature dim = output_size (d_model); d_ff = hidden_size.
    batch, seq = 2, 8
    d_model, d_ff = 32, 64

    key = jax.random.PRNGKey(0)
    kx, kp = jax.random.split(key)
    x = jax.random.normal(kx, (batch, seq, d_model), jnp.float32)
    params = init_params(kp, d_model, d_ff)

    out = feedforward_wrapper_add(x, params)
    out = jax.block_until_ready(out)
    assert out.shape == x.shape

    # Tight check against a precision-matched reference (bf16 matmul operands,
    # one-pass-variance f32 LayerNorm).
    ref_bf16 = _reference_bf16(x, params)
    assert jnp.allclose(out, ref_bf16, atol=2e-3, rtol=2e-3), (
        float(jnp.max(jnp.abs(out - ref_bf16))))

    # Loose semantic check against the full-f32 reference (bf16 drift bound).
    ref_f32 = _reference_f32(x, params)
    assert jnp.allclose(out, ref_f32, atol=1e-1, rtol=1e-1), (
        float(jnp.max(jnp.abs(out - ref_f32))))

    print("KERNEL_OK")
</pallas_src>

<mosaic_0001>
module attributes {stable_mosaic.version = 11 : i64} {
  func.func @kernel(%arg0: i32, %arg1: memref<16x128xf32, #tpu.memory_space<vmem>>, %arg2: memref<8x128xf32, #tpu.memory_space<vmem>>, %arg3: memref<1x128xf32, #tpu.memory_space<vmem>>, %arg4: memref<128x128xbf16, #tpu.memory_space<vmem>>, %arg5: memref<128x128xbf16, #tpu.memory_space<vmem>>, %arg6: memref<16x128xf32, #tpu.memory_space<vmem>>, %arg7: memref<16x128xf32, #tpu.memory_space<vmem>>) attributes {dimension_semantics = [#tpu.dimension_semantics<parallel>], iteration_bounds = array<i64: 1>, scalar_prefetch = 0 : i64, scratch_operands = 1 : i64, tpu.core_type = #tpu.core_type<tc>, window_params = [{transform_indices = @transform_0, window_bounds = array<i64: 16, 128>}, {pipeline_mode = #tpu.pipeline_mode<synchronous>, transform_indices = @transform_1, window_bounds = array<i64: 8, 128>}, {pipeline_mode = #tpu.pipeline_mode<synchronous>, transform_indices = @transform_2, window_bounds = array<i64: 1, 128>}, {pipeline_mode = #tpu.pipeline_mode<synchronous>, transform_indices = @transform_3, window_bounds = array<i64: 128, 128>}, {pipeline_mode = #tpu.pipeline_mode<synchronous>, transform_indices = @transform_4, window_bounds = array<i64: 128, 128>}, {transform_indices = @transform_5, window_bounds = array<i64: 16, 128>}]} {
    %c0 = arith.constant 0 : index
    %c0_0 = arith.constant 0 : index
    %0 = vector.load %arg1[%c0, %c0_0] : memref<16x128xf32, #tpu.memory_space<vmem>>, vector<16x128xf32>
    %c0_1 = arith.constant 0 : index
    %c0_2 = arith.constant 0 : index
    %1 = vector.load %arg2[%c0_1, %c0_2] : memref<8x128xf32, #tpu.memory_space<vmem>>, vector<8x128xf32>
    %2 = vector.extract_strided_slice %1 {offsets = [0, 0], sizes = [1, 128], strides = [1, 1]} : vector<8x128xf32> to vector<1x128xf32>
    %3 = vector.extract_strided_slice %1 {offsets = [1, 0], sizes = [1, 128], strides = [1, 1]} : vector<8x128xf32> to vector<1x128xf32>
    %4 = vector.extract_strided_slice %1 {offsets = [2, 0], sizes = [1, 128], strides = [1, 1]} : vector<8x128xf32> to vector<1x128xf32>
    %5 = vector.extract_strided_slice %1 {offsets = [3, 0], sizes = [1, 128], strides = [1, 1]} : vector<8x128xf32> to vector<1x128xf32>
    %6 = vector.extract_strided_slice %1 {offsets = [4, 0], sizes = [1, 128], strides = [1, 1]} : vector<8x128xf32> to vector<1x128xf32>
    %cst = arith.constant dense<0.000000e+00> : vector<16xf32>
    %7 = vector.multi_reduction <add>, %0, %cst [1] : vector<16x128xf32> to vector<16xf32>
    %8 = vector.shape_cast %7 : vector<16xf32> to vector<16x1xf32>
    %9 = arith.mulf %0, %0 : vector<16x128xf32>
    %cst_3 = arith.constant dense<0.000000e+00> : vector<16xf32>
    %10 = vector.multi_reduction <add>, %9, %cst_3 [1] : vector<16x128xf32> to vector<16xf32>
    %11 = vector.shape_cast %10 : vector<16xf32> to vector<16x1xf32>
    %cst_4 = arith.constant 3.125000e-02 : f32
    %12 = vector.broadcast %cst_4 : f32 to vector<16x1xf32>
    %13 = arith.mulf %8, %12 : vector<16x1xf32>
    %cst_5 = arith.constant 3.125000e-02 : f32
    %14 = vector.broadcast %cst_5 : f32 to vector<16x1xf32>
    %15 = arith.mulf %11, %14 : vector<16x1xf32>
    %16 = arith.mulf %13, %13 : vector<16x1xf32>
    %17 = arith.subf %15, %16 : vector<16x1xf32>
    %18 = vector.broadcast %13 : vector<16x1xf32> to vector<16x128xf32>
    %19 = arith.subf %0, %18 : vector<16x128xf32>
    %cst_6 = arith.constant 9.99999974E-6 : f32
    %20 = vector.broadcast %cst_6 : f32 to vector<16x1xf32>
    %21 = arith.addf %17, %20 : vector<16x1xf32>
    %22 = math.rsqrt %21 : vector<16x1xf32>
    %23 = vector.broadcast %22 : vector<16x1xf32> to vector<16x128xf32>
    %24 = arith.mulf %19, %23 : vector<16x128xf32>
    %25 = vector.broadcast %2 : vector<1x128xf32> to vector<16x128xf32>
    %26 = arith.mulf %24, %25 : vector<16x128xf32>
    %27 = vector.broadcast %3 : vector<1x128xf32> to vector<16x128xf32>
    %28 = arith.addf %26, %27 : vector<16x128xf32>
    %29 = arith.truncf %28 : vector<16x128xf32> to vector<16x128xbf16>
    %cst_7 = arith.constant 0.000000e+00 : f32
    %30 = vector.broadcast %cst_7 : f32 to vector<16x128xf32>
    %c0_8 = arith.constant 0 : index
    %c0_9 = arith.constant 0 : index
    %31 = vector.load %arg7[%c0_8, %c0_9] : memref<16x128xf32, #tpu.memory_space<vmem>>, vector<16x128xf32>
    tpu.vector_store %arg7[%c0_8, %c0_9], %30 {strides = array<i32>} : memref<16x128xf32, #tpu.memory_space<vmem>>, vector<16x128xf32>,
    %c0_i32 = arith.constant 0 : i32
    %c1_i32 = arith.constant 1 : i32
    %32 = arith.muli %c0_i32, %c1_i32 : i32
    %c0_i32_10 = arith.constant 0 : i32
    %33 = arith.addi %c0_i32_10, %32 : i32
    %c128_i32 = arith.constant 128 : i32
    %34 = arith.muli %33, %c128_i32 : i32
    %35 = tpu.assume_multiple %34, 128 : i32
    %c0_11 = arith.constant 0 : index
    %36 = arith.index_cast %35 : i32 to index
    %37 = vector.load %arg4[%c0_11, %36] : memref<128x128xbf16, #tpu.memory_space<vmem>>, vector<128x128xbf16>
    %c0_12 = arith.constant 0 : index
    %38 = arith.index_cast %35 : i32 to index
    %39 = vector.load %arg3[%c0_12, %38] : memref<1x128xf32, #tpu.memory_space<vmem>>, vector<1x128xf32>
    %cst_13 = arith.constant dense<0.000000e+00> : vector<16x128xf32>
    %40 = tpu.matmul %29, %37, %cst_13 {dimension_numbers = #tpu.dot_dimension_numbers<[1], [0], [0], [1], [0, 0, 1, 1], [], []>} : vector<16x128xbf16>, vector<128x128xbf16>, vector<16x128xf32> -> vector<16x128xf32>
    %41 = vector.broadcast %39 : vector<1x128xf32> to vector<16x128xf32>
    %42 = arith.addf %40, %41 : vector<16x128xf32>
    %cst_14 = arith.constant 0.000000e+00 : f32
    %43 = vector.broadcast %cst_14 : f32 to vector<16x128xf32>
    %44 = arith.maximumf %42, %43 : vector<16x128xf32>
    %45 = arith.truncf %44 : vector<16x128xf32> to vector<16x128xbf16>
    %46 = arith.index_cast %35 : i32 to index
    %c0_15 = arith.constant 0 : index
    %47 = vector.load %arg5[%46, %c0_15] : memref<128x128xbf16, #tpu.memory_space<vmem>>, vector<128x128xbf16>
    %c0_16 = arith.constant 0 : index
    %c0_17 = arith.constant 0 : index
    %48 = vector.load %arg7[%c0_16, %c0_17] : memref<16x128xf32, #tpu.memory_space<vmem>>, vector<16x128xf32>
    %cst_18 = arith.constant dense<0.000000e+00> : vector<16x128xf32>
    %49 = tpu.matmul %45, %47, %cst_18 {dimension_numbers = #tpu.dot_dimension_numbers<[1], [0], [0], [1], [0, 0, 1, 1], [], []>} : vector<16x128xbf16>, vector<128x128xbf16>, vector<16x128xf32> -> vector<16x128xf32>
    %50 = arith.addf %48, %49 : vector<16x128xf32>
    %c0_19 = arith.constant 0 : index
    %c0_20 = arith.constant 0 : index
    %51 = vector.load %arg7[%c0_19, %c0_20] : memref<16x128xf32, #tpu.memory_space<vmem>>, vector<16x128xf32>
    tpu.vector_store %arg7[%c0_19, %c0_20], %50 {strides = array<i32>} : memref<16x128xf32, #tpu.memory_space<vmem>>, vector<16x128xf32>,
    %c1_i32_21 = arith.constant 1 : i32
    %c0_22 = arith.constant 0 : index
    %c0_23 = arith.constant 0 : index
    %52 = vector.load %arg7[%c0_22, %c0_23] : memref<16x128xf32, #tpu.memory_space<vmem>>, vector<16x128xf32>
    %53 = arith.addf %0, %52 : vector<16x128xf32>
    %54 = vector.broadcast %4 : vector<1x128xf32> to vector<16x128xf32>
    %55 = arith.addf %53, %54 : vector<16x128xf32>
    %cst_24 = arith.constant dense<0.000000e+00> : vector<16xf32>
    %56 = vector.multi_reduction <add>, %55, %cst_24 [1] : vector<16x128xf32> to vector<16xf32>
    %57 = vector.shape_cast %56 : vector<16xf32> to vector<16x1xf32>
    %58 = arith.mulf %55, %55 : vector<16x128xf32>
    %cst_25 = arith.constant dense<0.000000e+00> : vector<16xf32>
    %59 = vector.multi_reduction <add>, %58, %cst_25 [1] : vector<16x128xf32> to vector<16xf32>
    %60 = vector.shape_cast %59 : vector<16xf32> to vector<16x1xf32>
    %cst_26 = arith.constant 3.125000e-02 : f32
    %61 = vector.broadcast %cst_26 : f32 to vector<16x1xf32>
    %62 = arith.mulf %57, %61 : vector<16x1xf32>
    %cst_27 = arith.constant 3.125000e-02 : f32
    %63 = vector.broadcast %cst_27 : f32 to vector<16x1xf32>
    %64 = arith.mulf %60, %63 : vector<16x1xf32>
    %65 = arith.mulf %62, %62 : vector<16x1xf32>
    %66 = arith.subf %64, %65 : vector<16x1xf32>
    %67 = vector.broadcast %62 : vector<16x1xf32> to vector<16x128xf32>
    %68 = arith.subf %55, %67 : vector<16x128xf32>
    %cst_28 = arith.constant 9.99999974E-6 : f32
    %69 = vector.broadcast %cst_28 : f32 to vector<16x1xf32>
    %70 = arith.addf %66, %69 : vector<16x1xf32>
    %71 = math.rsqrt %70 : vector<16x1xf32>
    %72 = vector.broadcast %71 : vector<16x1xf32> to vector<16x128xf32>
    %73 = arith.mulf %68, %72 : vector<16x128xf32>
    %74 = vector.broadcast %5 : vector<1x128xf32> to vector<16x128xf32>
    %75 = arith.mulf %73, %74 : vector<16x128xf32>
    %76 = vector.broadcast %6 : vector<1x128xf32> to vector<16x128xf32>
    %77 = arith.addf %75, %76 : vector<16x128xf32>
    %c0_29 = arith.constant 0 : index
    %c0_30 = arith.constant 0 : index
    %78 = vector.load %arg6[%c0_29, %c0_30] : memref<16x128xf32, #tpu.memory_space<vmem>>, vector<16x128xf32>
    tpu.vector_store %arg6[%c0_29, %c0_30], %77 {strides = array<i32>} : memref<16x128xf32, #tpu.memory_space<vmem>>, vector<16x128xf32>,
    return
  }
  func.func @transform_0(%arg0: i32) -> (i32, i32) {
    %c0_i32 = arith.constant 0 : i32
    %c0_i32_0 = arith.constant 0 : i32
    return %arg0, %c0_i32 : i32, i32
  }
  func.func @transform_1(%arg0: i32) -> (i32, i32) {
    %c0_i32 = arith.constant 0 : i32
    %c0_i32_0 = arith.constant 0 : i32
    %c0_i32_1 = arith.constant 0 : i32
    return %c0_i32, %c0_i32_0 : i32, i32
  }
  func.func @transform_2(%arg0: i32) -> (i32, i32) {
    %c0_i32 = arith.constant 0 : i32
    %c0_i32_0 = arith.constant 0 : i32
    %c0_i32_1 = arith.constant 0 : i32
    return %c0_i32, %c0_i32_0 : i32, i32
  }
  func.func @transform_3(%arg0: i32) -> (i32, i32) {
    %c0_i32 = arith.constant 0 : i32
    %c0_i32_0 = arith.constant 0 : i32
    %c0_i32_1 = arith.constant 0 : i32
    return %c0_i32, %c0_i32_0 : i32, i32
  }
  func.func @transform_4(%arg0: i32) -> (i32, i32) {
    %c0_i32 = arith.constant 0 : i32
    %c0_i32_0 = arith.constant 0 : i32
    %c0_i32_1 = arith.constant 0 : i32
    return %c0_i32, %c0_i32_0 : i32, i32
  }
  func.func @transform_5(%arg0: i32) -> (i32, i32) {
    %c0_i32 = arith.constant 0 : i32
    %c0_i32_0 = arith.constant 0 : i32
    return %arg0, %c0_i32 : i32, i32
  }
}

</mosaic_0001>

<llo_original>
// kernel: tpu_custom_call.1
$region0: #{tpu_custom_call.1}
  #allocation0 [shape = 'u32[]', space=smem, size = 0x4, offset = 0x4, fixed_abs, tag = 'smem constant byte address 0x4 - core index']
  #allocation1 [shape = 'u32[72,128]{1,0:T(1,128)}', space=vmem, size = 0x9000, scoped, tag = 'internal scratch']
  #allocation2 [shape = 'f32[16,128]{1,0:T(8,128)}', space=vmem, size = 0x2000, scoped, tag = 'scratch operand']
  %s0 = inlined_call_operand.hbm [shape: f32[16,128], index: 0, kind: input, shape index: {}]
  %s1 = inlined_call_operand.hbm [shape: f32[8,128], index: 1, kind: input, shape index: {}]
  %s2 = inlined_call_operand.vmem [shape: f32[1,128], index: 2, kind: input, shape index: {}]
  %s3 = inlined_call_operand.hbm [shape: bf16[128,128], index: 3, kind: input, shape index: {}]
  %s4 = inlined_call_operand.hbm [shape: bf16[128,128], index: 4, kind: input, shape index: {}]
  %s5 = inlined_call_operand.hbm [shape: f32[16,128], index: 5, kind: output, shape index: {}]
  %s6 = sld [smem:[#allocation0]]
  $region46: #{tpu_custom_call.1} parent=0
    _
  %s8 = ssub.s32 1, %s6
  %s9 = scalar_select 0, %s8, %s6
  $region1: #{tpu_custom_call.1} parent=0
    #allocation3 [shape = 'u8[8192]{0}', space=vmem, size = 0x2000, scoped, tag = 'input window, operand 0, single buffered']
    #allocation4 [shape = 's32[1]{0}', space=sflag, size = 0x4, scoped, tag = 'scoped memory for tpu_custom_call.1']
    #allocation5 [shape = 's32[1]{0}', space=sflag, size = 0x4, scoped, tag = 'scoped memory for tpu_custom_call.1']
    #allocation6 [shape = 'u8[4096]{0}', space=vmem, size = 0x1000, scoped, tag = 'input window, operand 1, single buffered']
    #allocation7 [shape = 's32[1]{0}', space=sflag, size = 0x4, scoped, tag = 'scoped memory for tpu_custom_call.1']
    #allocation8 [shape = 'u8[32768]{0}', space=vmem, size = 0x8000, scoped, tag = 'input window, operand 3, single buffered']
    #allocation9 [shape = 'u8[32768]{0}', space=vmem, size = 0x8000, scoped, tag = 'input window, operand 4, single buffered']
    #allocation10 [shape = 's32[1]{0}', space=sflag, size = 0x4, scoped, tag = 'scoped memory for tpu_custom_call.1']
    #allocation11 [shape = 'u8[8192]{0}', space=vmem, size = 0x2000, scoped, tag = 'output window, operand 0, single buffered']
    %10 = vsyncpa [#allocation4], 0
    %11 = vsyncpa [#allocation7], 0
    %12 = vsyncpa [#allocation10], 0
    %13 = vsyncpa [#allocation5], 0
    // Predicated region
    $region2: #{tpu_custom_call.1} parent=1 // pred_check
      _
    $region3: #{tpu_custom_call.1} parent=1 // pred_check_branch
      %15 = sbr.rel (0) target = $region5
    $region4: #{tpu_custom_call.1} parent=1 // pred_region
      %17 = vsyncadd [#allocation4], 0
      %s18 = sshll.u32 %s0, 4
      %s19 = int_to_ptr.hbm [resolvable:$true] %s18
      %s20 = sshll.u32 [#allocation3], 4
      %s21 = int_to_ptr.vmem [resolvable:$true] %s20
      %26 = dma.hbm_to_vmem [thread:$0]  %s19, 256, %s21, [#allocation4], 128, 128, 8
    $region5: #{tpu_custom_call.1} parent=1 // pred_fallthru
      _
    // Predicated region
    $region6: #{tpu_custom_call.1} parent=1 // pred_check
      _
    $region7: #{tpu_custom_call.1} parent=1 // pred_check_branch
      %28 = sbr.rel (0) target = $region9
    $region8: #{tpu_custom_call.1} parent=1 // pred_region
      %30 = vsyncadd [#allocation7], 0
      %s32 = sshll.u32 %s1, 4
      %s33 = int_to_ptr.hbm [resolvable:$true] %s32
      %s34 = sshll.u32 [#allocation6], 4
      %s35 = int_to_ptr.vmem [resolvable:$true] %s34
      %37 = dma.hbm_to_vmem [thread:$0]  %s33, 128, %s35, [#allocation7]
    $region9: #{tpu_custom_call.1} parent=1 // pred_fallthru
      _
    // Predicated region
    $region10: #{tpu_custom_call.1} parent=1 // pred_check
      _
    $region11: #{tpu_custom_call.1} parent=1 // pred_check_branch
      %39 = sbr.rel (0) target = $region13
    $region12: #{tpu_custom_call.1} parent=1 // pred_region
      _
    $region13: #{tpu_custom_call.1} parent=1 // pred_fallthru
      _
    // Predicated region
    $region14: #{tpu_custom_call.1} parent=1 // pred_check
      _
    $region15: #{tpu_custom_call.1} parent=1 // pred_check_branch
      %41 = sbr.rel (0) target = $region17
    $region16: #{tpu_custom_call.1} parent=1 // pred_region
      %43 = vsyncadd [#allocation7], 0
      %s44 = sshll.u32 %s3, 4
      %s45 = int_to_ptr.hbm [resolvable:$true] %s44
      %s46 = sshll.u32 [#allocation8], 4
      %s47 = int_to_ptr.vmem [resolvable:$true] %s46
      %52 = dma.hbm_to_vmem [thread:$0]  %s45, 1024, %s47, [#allocation7], 64, 64, 4
    $region17: #{tpu_custom_call.1} parent=1 // pred_fallthru
      _
    // Predicated region
    $region18: #{tpu_custom_call.1} parent=1 // pred_check
      _
    $region19: #{tpu_custom_call.1} parent=1 // pred_check_branch
      %54 = sbr.rel (0) target = $region21
    $region20: #{tpu_custom_call.1} parent=1 // pred_region
      %56 = vsyncadd [#allocation10], 0
      %s57 = sshll.u32 %s4, 4
      %s58 = int_to_ptr.hbm [resolvable:$true] %s57
      %s59 = sshll.u32 [#allocation9], 4
      %s60 = int_to_ptr.vmem [resolvable:$true] %s59
      %65 = dma.hbm_to_vmem [thread:$0]  %s58, 1024, %s60, [#allocation10], 64, 64, 4
    $region21: #{tpu_custom_call.1} parent=1 // pred_fallthru
      _
    // Predicated region
    $region22: #{tpu_custom_call.1} parent=1 // pred_check
      _
    $region23: #{tpu_custom_call.1} parent=1 // pred_check_branch
      %67 = sbr.rel (0) target = $region25
    $region24: #{tpu_custom_call.1} parent=1 // pred_region
      %69 = dma.done [#allocation4], 256
    $region25: #{tpu_custom_call.1} parent=1 // pred_fallthru
      _
    // Predicated region
    $region26: #{tpu_custom_call.1} parent=1 // pred_check
      _
    $region27: #{tpu_custom_call.1} parent=1 // pred_check_branch
      %71 = sbr.rel (0) target = $region29
    $region28: #{tpu_custom_call.1} parent=1 // pred_region
      %73 = dma.done [#allocation7], 128
    $region29: #{tpu_custom_call.1} parent=1 // pred_fallthru
      _
    // Predicated region
    $region30: #{tpu_custom_call.1} parent=1 // pred_check
      _
    $region31: #{tpu_custom_call.1} parent=1 // pred_check_branch
      %75 = sbr.rel (0) target = $region33
    $region32: #{tpu_custom_call.1} parent=1 // pred_region
      %77 = dma.done [#allocation7], 1024
    $region33: #{tpu_custom_call.1} parent=1 // pred_fallthru
      _
    // Predicated region
    $region34: #{tpu_custom_call.1} parent=1 // pred_check
      _
    $region35: #{tpu_custom_call.1} parent=1 // pred_check_branch
      %79 = sbr.rel (0) target = $region37
    $region36: #{tpu_custom_call.1} parent=1 // pred_region
      %81 = dma.done [#allocation10], 1024
    $region37: #{tpu_custom_call.1} parent=1 // pred_fallthru
      _
    %v82 = vld [vmem:[#allocation3] sm:$0xff]
    %v83 = vld [vmem:[#allocation3 + $0x8] sm:$0xff]
    %v84 = vld [vmem:[#allocation6] sm:$0xff]
    %85 = vadd.xlane.f32.xlu0 %v82
    %v86 = vpop.xlane.xlu0 %85
    %87 = vadd.xlane.f32.xlu0 %v83
    %v88 = vpop.xlane.xlu0 %87
    %v89 = vmul.f32 %v82, %v82
    %v90 = vmul.f32 %v83, %v83
    %91 = vadd.xlane.f32.xlu0 %v89
    %v92 = vpop.xlane.xlu0 %91
    %93 = vadd.xlane.f32.xlu0 %v90
    %v94 = vpop.xlane.xlu0 %93
    %v95 = vmul.f32 %v86, 0.03125
    %v96 = vmul.f32 %v88, 0.03125
    %v97 = vmul.f32 %v92, 0.03125
    %v98 = vmul.f32 %v94, 0.03125
    %v99 = vmul.f32 %v95, %v95
    %v100 = vmul.f32 %v96, %v96
    %v101 = vsub.f32 %v97, %v99
    %v102 = vsub.f32 %v98, %v100
    %v103 = vsub.f32 %v82, %v95
    %v104 = vsub.f32 %v83, %v96
    %v105 = vadd.f32 %v101, 1e-05
    %v106 = vadd.f32 %v102, 1e-05
    %v107 = vrsqrt.pop %v105
    %v108 = vmul.f32 %v107, %v105
    %v109 = vmul.f32 %v108, %v107
    %v110 = vmul.f32 0.5, %v109
    %v111 = vsub.f32 1.5, %v110
    %v112 = vmul.f32 %v107, %v111
    %vm113 = vweird.f32 %v105
    %vm114 = vweird.f32 %v107
    %vm115 = vmor %vm113, %vm114
    %v116 = vsel %vm115, %v107, %v112
    %v117 = vrsqrt.pop %v106
    %v118 = vmul.f32 %v117, %v106
    %v119 = vmul.f32 %v118, %v117
    %v120 = vmul.f32 0.5, %v119
    %v121 = vsub.f32 1.5, %v120
    %v122 = vmul.f32 %v117, %v121
    %vm123 = vweird.f32 %v106
    %vm124 = vweird.f32 %v117
    %vm125 = vmor %vm123, %vm124
    %v126 = vsel %vm125, %v117, %v122
    %v127 = vmul.f32 %v103, %v116
    %v128 = vmul.f32 %v104, %v126
    %v129 = vperm.slane %v84, 0
    %v130 = vmul.f32 %v127, %v129
    %v131 = vmul.f32 %v128, %v129
    %v132 = vperm.slane %v84, 1
    %v133 = vadd.f32 %v130, %v132
    %v134 = vadd.f32 %v131, %v132
    %v135 = vpack.c.bf16 %v134, %v133
    %136 = vst [vmem:[#allocation2] sm:$0xff] 0.0
    %137 = vst [vmem:[#allocation2 + $0x8] sm:$0xff] 0.0
    %v138 = vld [vmem:[#allocation8] sm:$0xf]
    %v139 = vld [vmem:[#allocation8 + $0x4] sm:$0xf]
    %v140 = vld [vmem:[#allocation8 + $0x8] sm:$0xf]
    %v141 = vld [vmem:[#allocation8 + $0xc] sm:$0xf]
    %v142 = vld [vmem:[#allocation8 + $0x10] sm:$0xf]
    %v143 = vld [vmem:[#allocation8 + $0x14] sm:$0xf]
    %v144 = vld [vmem:[#allocation8 + $0x18] sm:$0xf]
    %v145 = vld [vmem:[#allocation8 + $0x1c] sm:$0xf]
    %v146 = vld [vmem:[#allocation8 + $0x20] sm:$0xf]
    %v147 = vld [vmem:[#allocation8 + $0x24] sm:$0xf]
    %v148 = vld [vmem:[#allocation8 + $0x28] sm:$0xf]
    %v149 = vld [vmem:[#allocation8 + $0x2c] sm:$0xf]
    %v150 = vld [vmem:[#allocation8 + $0x30] sm:$0xf]
    %v151 = vld [vmem:[#allocation8 + $0x34] sm:$0xf]
    %v152 = vld [vmem:[#allocation8 + $0x38] sm:$0xf]
    %v153 = vld [vmem:[#allocation8 + $0x3c] sm:$0xf]
    %v154 = vld [vmem:[%s2] sm:$0x1]
    %v156 = vperm.slane %v154, 0
    %v174 = vunpack.c.l.b16 %v138
    %v175 = vunpack.c.l.b16 %v139
    %v176 = vunpack.c.l.b16 %v140
    %v177 = vunpack.c.l.b16 %v141
    %v178 = vunpack.c.l.b16 %v142
    %v179 = vunpack.c.l.b16 %v143
    %v180 = vunpack.c.l.b16 %v144
    %v181 = vunpack.c.l.b16 %v145
    %v182 = vunpack.c.l.b16 %v146
    %v183 = vunpack.c.l.b16 %v147
    %v184 = vunpack.c.l.b16 %v148
    %v185 = vunpack.c.l.b16 %v149
    %v186 = vunpack.c.l.b16 %v150
    %v187 = vunpack.c.l.b16 %v151
    %v188 = vunpack.c.l.b16 %v152
    %v189 = vunpack.c.l.b16 %v153
    %v190 = vpack.c.b16 %v175, %v174
    %v191 = vpack.c.b16 %v177, %v176
    %v192 = vpack.c.b16 %v179, %v178
    %v193 = vpack.c.b16 %v181, %v180
    %v194 = vpack.c.b16 %v183, %v182
    %v195 = vpack.c.b16 %v185, %v184
    %v196 = vpack.c.b16 %v187, %v186
    %v197 = vpack.c.b16 %v189, %v188
    %206 = vmatpush.bf16.msra.mxu0 %v197
    %207 = vmatpush.bf16.msra.mxu0 %v196
    %208 = vmatpush.bf16.msra.mxu0 %v195
    %209 = vmatpush.bf16.msra.mxu0 %v194
    %210 = vmatpush.bf16.msra.mxu0 %v193
    %211 = vmatpush.bf16.msra.mxu0 %v192
    %212 = vmatpush.bf16.msra.mxu0 %v191
    %213 = vmatpush.bf16.msra.mxu0 %v190
    %214 = vmatmul.bf16.gmra.mxu0 %v135
    %v215 = vpop.f32.mrf.mxu0
    %v216 = vadd.f32 %v156, %v215
    %v217 = vpop.f32.mrf.mxu0
    %v218 = vadd.f32 %v156, %v217
    %219 = vdwg.mxu0
    %v220 = vmax.f32 %v216, 0.0
    %v221 = vmax.f32 %v218, 0.0
    %v222 = vpack.c.bf16 %v221, %v220
    %v223 = vld [vmem:[#allocation9] sm:$0xf]
    %v224 = vld [vmem:[#allocation9 + $0x4] sm:$0xf]
    %v225 = vld [vmem:[#allocation9 + $0x8] sm:$0xf]
    %v226 = vld [vmem:[#allocation9 + $0xc] sm:$0xf]
    %v227 = vld [vmem:[#allocation9 + $0x10] sm:$0xf]
    %v228 = vld [vmem:[#allocation9 + $0x14] sm:$0xf]
    %v229 = vld [vmem:[#allocation9 + $0x18] sm:$0xf]
    %v230 = vld [vmem:[#allocation9 + $0x1c] sm:$0xf]
    %v231 = vld [vmem:[#allocation9 + $0x20] sm:$0xf]
    %v232 = vld [vmem:[#allocation9 + $0x24] sm:$0xf]
    %v233 = vld [vmem:[#allocation9 + $0x28] sm:$0xf]
    %v234 = vld [vmem:[#allocation9 + $0x2c] sm:$0xf]
    %v235 = vld [vmem:[#allocation9 + $0x30] sm:$0xf]
    %v236 = vld [vmem:[#allocation9 + $0x34] sm:$0xf]
    %v237 = vld [vmem:[#allocation9 + $0x38] sm:$0xf]
    %v238 = vld [vmem:[#allocation9 + $0x3c] sm:$0xf]
    %v239 = vld [vmem:[#allocation2] sm:$0xff]
    %v240 = vld [vmem:[#allocation2 + $0x8] sm:$0xff]
    %v257 = vunpack.c.l.b16 %v223
    %v258 = vunpack.c.l.b16 %v224
    %v259 = vunpack.c.l.b16 %v225
    %v260 = vunpack.c.l.b16 %v226
    %v261 = vunpack.c.l.b16 %v227
    %v262 = vunpack.c.l.b16 %v228
    %v263 = vunpack.c.l.b16 %v229
    %v264 = vunpack.c.l.b16 %v230
    %v265 = vunpack.c.l.b16 %v231
    %v266 = vunpack.c.l.b16 %v232
    %v267 = vunpack.c.l.b16 %v233
    %v268 = vunpack.c.l.b16 %v234
    %v269 = vunpack.c.l.b16 %v235
    %v270 = vunpack.c.l.b16 %v236
    %v271 = vunpack.c.l.b16 %v237
    %v272 = vunpack.c.l.b16 %v238
    %v273 = vpack.c.b16 %v258, %v257
    %v274 = vpack.c.b16 %v260, %v259
    %v275 = vpack.c.b16 %v262, %v261
    %v276 = vpack.c.b16 %v264, %v263
    %v277 = vpack.c.b16 %v266, %v265
    %v278 = vpack.c.b16 %v268, %v267
    %v279 = vpack.c.b16 %v270, %v269
    %v280 = vpack.c.b16 %v272, %v271
    %289 = vmatpush.bf16.msra.mxu0 %v280
    %290 = vmatpush.bf16.msra.mxu0 %v279
    %291 = vmatpush.bf16.msra.mxu0 %v278
    %292 = vmatpush.bf16.msra.mxu0 %v277
    %293 = vmatpush.bf16.msra.mxu0 %v276
    %294 = vmatpush.bf16.msra.mxu0 %v275
    %295 = vmatpush.bf16.msra.mxu0 %v274
    %296 = vmatpush.bf16.msra.mxu0 %v273
    %297 = vmatmul.bf16.gmra.mxu0 %v222
    %v298 = vpop.f32.mrf.mxu0
    %v299 = vadd.f32 0.0, %v298
    %v300 = vpop.f32.mrf.mxu0
    %v301 = vadd.f32 0.0, %v300
    %302 = vdwg.mxu0
    %v303 = vadd.f32 %v239, %v299
    %v304 = vadd.f32 %v240, %v301
    %305 = vst [vmem:[#allocation2] sm:$0xff] %v303
    %306 = vst [vmem:[#allocation2 + $0x8] sm:$0xff] %v304
    %v307 = vld [vmem:[#allocation2] sm:$0xff]
    %v308 = vld [vmem:[#allocation2 + $0x8] sm:$0xff]
    %v309 = vadd.f32 %v82, %v307
    %v310 = vadd.f32 %v83, %v308
    %v311 = vperm.slane %v84, 2
    %v312 = vadd.f32 %v309, %v311
    %v313 = vadd.f32 %v310, %v311
    %314 = vadd.xlane.f32.xlu0 %v312
    %v315 = vpop.xlane.xlu0 %314
    %316 = vadd.xlane.f32.xlu0 %v313
    %v317 = vpop.xlane.xlu0 %316
    %v318 = vmul.f32 %v312, %v312
    %v319 = vmul.f32 %v313, %v313
    %320 = vadd.xlane.f32.xlu0 %v318
    %v321 = vpop.xlane.xlu0 %320
    %322 = vadd.xlane.f32.xlu0 %v319
    %v323 = vpop.xlane.xlu0 %322
    %v324 = vmul.f32 %v315, 0.03125
    %v325 = vmul.f32 %v317, 0.03125
    %v326 = vmul.f32 %v321, 0.03125
    %v327 = vmul.f32 %v323, 0.03125
    %v328 = vmul.f32 %v324, %v324
    %v329 = vmul.f32 %v325, %v325
    %v330 = vsub.f32 %v326, %v328
    %v331 = vsub.f32 %v327, %v329
    %v332 = vsub.f32 %v312, %v324
    %v333 = vsub.f32 %v313, %v325
    %v334 = vadd.f32 %v330, 1e-05
    %v335 = vadd.f32 %v331, 1e-05
    %v336 = vrsqrt.pop %v334
    %v337 = vmul.f32 %v336, %v334
    %v338 = vmul.f32 %v337, %v336
    %v339 = vmul.f32 0.5, %v338
    %v340 = vsub.f32 1.5, %v339
    %v341 = vmul.f32 %v336, %v340
    %vm342 = vweird.f32 %v334
    %vm343 = vweird.f32 %v336
    %vm344 = vmor %vm342, %vm343
    %v345 = vsel %vm344, %v336, %v341
    %v346 = vrsqrt.pop %v335
    %v347 = vmul.f32 %v346, %v335
    %v348 = vmul.f32 %v347, %v346
    %v349 = vmul.f32 0.5, %v348
    %v350 = vsub.f32 1.5, %v349
    %v351 = vmul.f32 %v346, %v350
    %vm352 = vweird.f32 %v335
    %vm353 = vweird.f32 %v346
    %vm354 = vmor %vm352, %vm353
    %v355 = vsel %vm354, %v346, %v351
    %v356 = vmul.f32 %v332, %v345
    %v357 = vmul.f32 %v333, %v355
    %v358 = vperm.slane %v84, 3
    %v359 = vmul.f32 %v356, %v358
    %v360 = vmul.f32 %v357, %v358
    %v361 = vperm.slane %v84, 4
    %v362 = vadd.f32 %v359, %v361
    %v363 = vadd.f32 %v360, %v361
    %364 = vst [vmem:[#allocation11] sm:$0xff] %v362
    %365 = vst [vmem:[#allocation11 + $0x8] sm:$0xff] %v363
    // Predicated region
    $region38: #{tpu_custom_call.1} parent=1 // pred_check
      _
    $region39: #{tpu_custom_call.1} parent=1 // pred_check_branch
      %367 = sbr.rel (0) target = $region41
    $region40: #{tpu_custom_call.1} parent=1 // pred_region
      %369 = vsyncadd [#allocation5], 0
      %s370 = sshll.u32 [#allocation11], 4
      %s371 = int_to_ptr.vmem [resolvable:$true] %s370
      %s372 = sshll.u32 %s5, 4
      %s373 = int_to_ptr.hbm [resolvable:$true] %s372
      %378 = dma.vmem_to_hbm [thread:$0]  %s371, 256, %s373, [#allocation5], 128, 128, 8
    $region41: #{tpu_custom_call.1} parent=1 // pred_fallthru
      _
    // Predicated region
    $region42: #{tpu_custom_call.1} parent=1 // pred_check
      _
    $region43: #{tpu_custom_call.1} parent=1 // pred_check_branch
      %380 = sbr.rel (0) target = $region45
    $region44: #{tpu_custom_call.1} parent=1 // pred_region
      %382 = dma.done [#allocation5], 256
    $region45: #{tpu_custom_call.1} parent=1 // pred_fallthru
      _
    %383 = vsyncpa [#allocation4], 1
    %384 = vsyncpa [#allocation7], 1
    %385 = vsyncpa [#allocation10], 1
    %386 = vsyncpa [#allocation5], 1

</llo_original>
